<compile_context>
chip_gen: v7x
topology: tpu7x:2x2x1
jax: 0.10.0
libtpu: 0.0.40
codegen_flags: <defaults>
</compile_context>

<pallas_src>
import functools

import jax
import jax.numpy as jnp
from jax.experimental import pallas as pl
from jax.experimental.pallas import tpu as pltpu

IN_DIM = 61          # Scan_NN input/output features
HID_DIM = 32         # encoder width
K_PAD = 64           # 61 -> 64 (sublane-aligned contraction dim / dec slot width)
OUT_LANES = 128      # packed output slab: [dec(61) pad(3) enc(32) pad(32)]
NEG_SLOPE = 0.01     # PyTorch nn.LeakyReLU default


def _round_up(n, m):
    return ((n + m - 1) // m) * m


def scan_nn_kernel(x_ref, w1_ref, b1_ref, w2c_ref, b2c_ref, out_ref):
    # x_ref: (TILE_B, 64); weight refs are VMEM-resident across grid steps.
    h = jnp.dot(x_ref[...], w1_ref[...],
                preferred_element_type=jnp.float32) + b1_ref[...]        # (TB, 32)
    enc = jnp.where(h > 0, h, NEG_SLOPE * h)                             # LeakyReLU
    # Augmented decoder: cols [0:61] = W2 (dec), cols [64:96] = I (copies enc).
    out = jnp.dot(enc, w2c_ref[...],
                  preferred_element_type=jnp.float32) + b2c_ref[...]     # (TB, 128)
    out_ref[...] = out.astype(out_ref.dtype)                             # one dense store


@functools.partial(jax.jit, static_argnames=("tile_b",))
def scan_nn_forward(x, w1, b1, w2, b2, *, tile_b=1024):
    """x: (B, 61); w1: (61, 32); b1: (1, 32); w2: (32, 61); b2: (1, 61).

    Weights are stored (in_features, out_features), i.e. already transposed
    relative to torch.nn.Linear.weight, so the kernel computes x @ W + b.
    Returns (dec, enc), matching Scan_NN.forward.
    """
    B = x.shape[0]
    tb = min(tile_b, _round_up(max(B, 1), 8))      # batch tile, multiple of 8
    b_pad = _round_up(B, tb)                       # wrapper-side tail padding

    # Pad batch to a tile multiple and K from 61 -> 64.
    x_p = jnp.pad(x.astype(jnp.float32), ((0, b_pad - B), (0, K_PAD - IN_DIM)))
    w1_p = jnp.pad(w1.astype(jnp.float32), ((0, K_PAD - IN_DIM), (0, 0)))   # (64, 32)
    b1_p = b1.astype(jnp.float32).reshape(1, HID_DIM)

    # Augmented decoder weight/bias producing the packed [dec | enc] slab.
    w2c = jnp.zeros((HID_DIM, OUT_LANES), jnp.float32)
    w2c = w2c.at[:, :IN_DIM].set(w2.astype(jnp.float32))
    w2c = w2c.at[:, K_PAD:K_PAD + HID_DIM].set(jnp.eye(HID_DIM, dtype=jnp.float32))
    b2c = jnp.zeros((1, OUT_LANES), jnp.float32)
    b2c = b2c.at[:, :IN_DIM].set(b2.astype(jnp.float32))

    grid = (b_pad // tb,)
    out = pl.pallas_call(
        scan_nn_kernel,
        out_shape=jax.ShapeDtypeStruct((b_pad, OUT_LANES), jnp.float32),
        grid_spec=pltpu.PrefetchScalarGridSpec(
            num_scalar_prefetch=0,
            grid=grid,
            in_specs=[
                pl.BlockSpec((tb, K_PAD), lambda i: (i, 0)),        # x streams per tile
                pl.BlockSpec((K_PAD, HID_DIM), lambda i: (0, 0)),   # resident weights
                pl.BlockSpec((1, HID_DIM), lambda i: (0, 0)),
                pl.BlockSpec((HID_DIM, OUT_LANES), lambda i: (0, 0)),
                pl.BlockSpec((1, OUT_LANES), lambda i: (0, 0)),
            ],
            out_specs=pl.BlockSpec((tb, OUT_LANES), lambda i: (i, 0)),
        ),
        compiler_params=pltpu.CompilerParams(
            # Batch tiles are independent -> shard across TCs on v7x megacore.
            dimension_semantics=("parallel",),
        ),
    )(x_p, w1_p, b1_p, w2c, b2c)

    dec = out[:B, :IN_DIM]
    enc = out[:B, K_PAD:K_PAD + HID_DIM]
    return dec, enc


def init_params(key):
    # nn.Linear-style uniform(-1/sqrt(fan_in), 1/sqrt(fan_in)) init, with
    # weights laid out (in_features, out_features).
    k1, k2, k3, k4 = jax.random.split(key, 4)
    lim1 = 1.0 / jnp.sqrt(jnp.float32(IN_DIM))
    lim2 = 1.0 / jnp.sqrt(jnp.float32(HID_DIM))
    w1 = jax.random.uniform(k1, (IN_DIM, HID_DIM), jnp.float32, -lim1, lim1)
    b1 = jax.random.uniform(k2, (1, HID_DIM), jnp.float32, -lim1, lim1)
    w2 = jax.random.uniform(k3, (HID_DIM, IN_DIM), jnp.float32, -lim2, lim2)
    b2 = jax.random.uniform(k4, (1, IN_DIM), jnp.float32, -lim2, lim2)
    return w1, b1, w2, b2


def _reference(x, w1, b1, w2, b2):
    h = x @ w1 + b1
    enc = jnp.where(h > 0, h, NEG_SLOPE * h)
    dec = enc @ w2 + b2
    return dec, enc


if __name__ == "__main__":
    key = jax.random.PRNGKey(0)
    kx, kp, kx2 = jax.random.split(key, 3)
    w1, b1, w2, b2 = init_params(kp)

    # Small batch (single grid step).
    B = 8
    x = jax.random.normal(kx, (B, IN_DIM), jnp.float32)
    dec, enc = scan_nn_forward(x, w1, b1, w2, b2, tile_b=1024)
    jax.block_until_ready((dec, enc))
    dec_ref, enc_ref = _reference(x, w1, b1, w2, b2)
    assert dec.shape == (B, IN_DIM) and enc.shape == (B, HID_DIM)
    assert jnp.allclose(enc, enc_ref, atol=1e-5, rtol=1e-5)
    assert jnp.allclose(dec, dec_ref, atol=1e-5, rtol=1e-5)

    # Larger, non-multiple-of-tile batch exercising the grid + tail padding.
    B2 = 1000
    x2 = jax.random.normal(kx2, (B2, IN_DIM), jnp.float32)
    dec2, enc2 = scan_nn_forward(x2, w1, b1, w2, b2, tile_b=256)
    jax.block_until_ready((dec2, enc2))
    dec2_ref, enc2_ref = _reference(x2, w1, b1, w2, b2)
    assert dec2.shape == (B2, IN_DIM) and enc2.shape == (B2, HID_DIM)
    assert jnp.allclose(enc2, enc2_ref, atol=1e-5, rtol=1e-5)
    assert jnp.allclose(dec2, dec2_ref, atol=1e-5, rtol=1e-5)

    print("KERNEL_OK")
</pallas_src>

<mosaic_0001>
module attributes {stable_mosaic.version = 11 : i64} {
  func.func @scan_nn_kernel(%arg0: i32, %arg1: memref<8x64xf32, #tpu.memory_space<vmem>>, %arg2: memref<64x32xf32, #tpu.memory_space<vmem>>, %arg3: memref<1x32xf32, #tpu.memory_space<vmem>>, %arg4: memref<32x128xf32, #tpu.memory_space<vmem>>, %arg5: memref<1x128xf32, #tpu.memory_space<vmem>>, %arg6: memref<8x128xf32, #tpu.memory_space<vmem>>) attributes {dimension_semantics = [#tpu.dimension_semantics<parallel>], iteration_bounds = array<i64: 1>, scalar_prefetch = 0 : i64, scratch_operands = 0 : i64, tpu.core_type = #tpu.core_type<tc>, window_params = [{transform_indices = @transform_0, window_bounds = array<i64: 8, 64>}, {pipeline_mode = #tpu.pipeline_mode<synchronous>, transform_indices = @transform_1, window_bounds = array<i64: 64, 32>}, {pipeline_mode = #tpu.pipeline_mode<synchronous>, transform_indices = @transform_2, window_bounds = array<i64: 1, 32>}, {pipeline_mode = #tpu.pipeline_mode<synchronous>, transform_indices = @transform_3, window_bounds = array<i64: 32, 128>}, {pipeline_mode = #tpu.pipeline_mode<synchronous>, transform_indices = @transform_4, window_bounds = array<i64: 1, 128>}, {transform_indices = @transform_5, window_bounds = array<i64: 8, 128>}]} {
    %c0 = arith.constant 0 : index
    %c0_0 = arith.constant 0 : index
    %0 = vector.load %arg1[%c0, %c0_0] : memref<8x64xf32, #tpu.memory_space<vmem>>, vector<8x64xf32>
    %c0_1 = arith.constant 0 : index
    %c0_2 = arith.constant 0 : index
    %1 = vector.load %arg2[%c0_1, %c0_2] : memref<64x32xf32, #tpu.memory_space<vmem>>, vector<64x32xf32>
    %cst = arith.constant dense<0.000000e+00> : vector<8x32xf32>
    %2 = tpu.matmul %0, %1, %cst {dimension_numbers = #tpu.dot_dimension_numbers<[1], [0], [0], [1], [0, 0, 1, 1], [], []>} : vector<8x64xf32>, vector<64x32xf32>, vector<8x32xf32> -> vector<8x32xf32>
    %c0_3 = arith.constant 0 : index
    %c0_4 = arith.constant 0 : index
    %3 = vector.load %arg3[%c0_3, %c0_4] : memref<1x32xf32, #tpu.memory_space<vmem>>, vector<1x32xf32>
    %4 = vector.broadcast %3 : vector<1x32xf32> to vector<8x32xf32>
    %5 = arith.addf %2, %4 : vector<8x32xf32>
    %cst_5 = arith.constant 0.000000e+00 : f32
    %6 = vector.broadcast %cst_5 : f32 to vector<8x32xf32>
    %7 = arith.cmpf ogt, %5, %6 : vector<8x32xf32>
    %cst_6 = arith.constant 0.00999999977 : f32
    %8 = vector.broadcast %cst_6 : f32 to vector<8x32xf32>
    %9 = arith.mulf %8, %5 : vector<8x32xf32>
    %10 = arith.select %7, %5, %9 : vector<8x32xi1>, vector<8x32xf32>
    %c0_7 = arith.constant 0 : index
    %c0_8 = arith.constant 0 : index
    %11 = vector.load %arg4[%c0_7, %c0_8] : memref<32x128xf32, #tpu.memory_space<vmem>>, vector<32x128xf32>
    %cst_9 = arith.constant dense<0.000000e+00> : vector<8x128xf32>
    %12 = tpu.matmul %10, %11, %cst_9 {dimension_numbers = #tpu.dot_dimension_numbers<[1], [0], [0], [1], [0, 0, 1, 1], [], []>} : vector<8x32xf32>, vector<32x128xf32>, vector<8x128xf32> -> vector<8x128xf32>
    %c0_10 = arith.constant 0 : index
    %c0_11 = arith.constant 0 : index
    %13 = vector.load %arg5[%c0_10, %c0_11] : memref<1x128xf32, #tpu.memory_space<vmem>>, vector<1x128xf32>
    %14 = vector.broadcast %13 : vector<1x128xf32> to vector<8x128xf32>
    %15 = arith.addf %12, %14 : vector<8x128xf32>
    %c0_12 = arith.constant 0 : index
    %c0_13 = arith.constant 0 : index
    %16 = vector.load %arg6[%c0_12, %c0_13] : memref<8x128xf32, #tpu.memory_space<vmem>>, vector<8x128xf32>
    tpu.vector_store %arg6[%c0_12, %c0_13], %15 {strides = array<i32>} : memref<8x128xf32, #tpu.memory_space<vmem>>, vector<8x128xf32>,
    return
  }
  func.func @transform_0(%arg0: i32) -> (i32, i32) {
    %c0_i32 = arith.constant 0 : i32
    %c0_i32_0 = arith.constant 0 : i32
    return %arg0, %c0_i32 : i32, i32
  }
  func.func @transform_1(%arg0: i32) -> (i32, i32) {
    %c0_i32 = arith.constant 0 : i32
    %c0_i32_0 = arith.constant 0 : i32
    %c0_i32_1 = arith.constant 0 : i32
    return %c0_i32, %c0_i32_0 : i32, i32
  }
  func.func @transform_2(%arg0: i32) -> (i32, i32) {
    %c0_i32 = arith.constant 0 : i32
    %c0_i32_0 = arith.constant 0 : i32
    %c0_i32_1 = arith.constant 0 : i32
    return %c0_i32, %c0_i32_0 : i32, i32
  }
  func.func @transform_3(%arg0: i32) -> (i32, i32) {
    %c0_i32 = arith.constant 0 : i32
    %c0_i32_0 = arith.constant 0 : i32
    %c0_i32_1 = arith.constant 0 : i32
    return %c0_i32, %c0_i32_0 : i32, i32
  }
  func.func @transform_4(%arg0: i32) -> (i32, i32) {
    %c0_i32 = arith.constant 0 : i32
    %c0_i32_0 = arith.constant 0 : i32
    %c0_i32_1 = arith.constant 0 : i32
    return %c0_i32, %c0_i32_0 : i32, i32
  }
  func.func @transform_5(%arg0: i32) -> (i32, i32) {
    %c0_i32 = arith.constant 0 : i32
    %c0_i32_0 = arith.constant 0 : i32
    return %arg0, %c0_i32 : i32, i32
  }
}

</mosaic_0001>

<llo_original>
// kernel: scan_nn_forward.1
$region0: #{scan_nn_forward.1}
  #allocation0 [shape = 'u32[]', space=smem, size = 0x4, offset = 0x4, fixed_abs, tag = 'smem constant byte address 0x4 - core index']
  #allocation1 [shape = 'u32[144,128]{1,0:T(1,128)}', space=vmem, size = 0x12000, scoped, tag = 'internal scratch']
  %s0 = inlined_call_operand.vmem [shape: f32[8,64], index: 0, kind: input, shape index: {}]
  %s1 = inlined_call_operand.vmem [shape: f32[64,32], index: 1, kind: input, shape index: {}]
  %s2 = inlined_call_operand.vmem [shape: f32[1,32], index: 2, kind: input, shape index: {}]
  %s3 = inlined_call_operand.vmem [shape: f32[32,128], index: 3, kind: input, shape index: {}]
  %s4 = inlined_call_operand.vmem [shape: f32[1,128], index: 4, kind: input, shape index: {}]
  %s5 = inlined_call_operand.vmem [shape: f32[8,128], index: 5, kind: output, shape index: {}]
  %s6 = sld [smem:[#allocation0]]
  $region30: #{scan_nn_forward.1} parent=0
    _
  %s8 = ssub.s32 1, %s6
  %s9 = scalar_select 0, %s8, %s6
  // Predicated region
  $region2: #{scan_nn_forward.1} parent=0 // pred_check
    _
  $region3: #{scan_nn_forward.1} parent=0 // pred_check_branch
    %11 = sbr.rel (0) target = $region5
  $region4: #{scan_nn_forward.1} parent=0 // pred_region
    _
  $region5: #{scan_nn_forward.1} parent=0 // pred_fallthru
    _
  // Predicated region
  $region6: #{scan_nn_forward.1} parent=0 // pred_check
    _
  $region7: #{scan_nn_forward.1} parent=0 // pred_check_branch
    %13 = sbr.rel (0) target = $region9
  $region8: #{scan_nn_forward.1} parent=0 // pred_region
    _
  $region9: #{scan_nn_forward.1} parent=0 // pred_fallthru
    _
  // Predicated region
  $region10: #{scan_nn_forward.1} parent=0 // pred_check
    _
  $region11: #{scan_nn_forward.1} parent=0 // pred_check_branch
    %15 = sbr.rel (0) target = $region13
  $region12: #{scan_nn_forward.1} parent=0 // pred_region
    _
  $region13: #{scan_nn_forward.1} parent=0 // pred_fallthru
    _
  // Predicated region
  $region14: #{scan_nn_forward.1} parent=0 // pred_check
    _
  $region15: #{scan_nn_forward.1} parent=0 // pred_check_branch
    %17 = sbr.rel (0) target = $region17
  $region16: #{scan_nn_forward.1} parent=0 // pred_region
    _
  $region17: #{scan_nn_forward.1} parent=0 // pred_fallthru
    _
  // Predicated region
  $region18: #{scan_nn_forward.1} parent=0 // pred_check
    _
  $region19: #{scan_nn_forward.1} parent=0 // pred_check_branch
    %19 = sbr.rel (0) target = $region21
  $region20: #{scan_nn_forward.1} parent=0 // pred_region
    _
  $region21: #{scan_nn_forward.1} parent=0 // pred_fallthru
    _
  %v20 = vld [vmem:[%s0] sm:$0xff]
  %v21 = vld [vmem:[%s1] sm:$0xff]
  %v22 = vld [vmem:[%s1 + $0x8] sm:$0xff]
  %v23 = vld [vmem:[%s1 + $0x10] sm:$0xff]
  %v24 = vld [vmem:[%s1 + $0x18] sm:$0xff]
  %v25 = vld [vmem:[%s1 + $0x20] sm:$0xff]
  %v26 = vld [vmem:[%s1 + $0x28] sm:$0xff]
  %v27 = vld [vmem:[%s1 + $0x30] sm:$0xff]
  %v28 = vld [vmem:[%s1 + $0x38] sm:$0xff]
  %v29 = vld [vmem:[%s2] sm:$0x1]
  %v31 = vlaneseq
  %v32 = vshrl.u32 %v31, 7
  %v33 = vsub.s32 0, %v32
  %v34 = vrot.slane %v29, %v33
  %vm36 = vcmask 523264
  %v38 = vsel %vm36, %v20, 0
  %40 = vmatprep.subr.mxu0 0.0
  %41 = vmatpush1.msra.mxu0 %v21
  %42 = vmatprep.subr.mxu0 0.0
  %43 = vmatpush1.msra.mxu0 %v22
  %44 = vmatprep.subr.mxu0 0.0
  %45 = vmatpush1.msra.mxu0 %v23
  %46 = vmatprep.subr.mxu0 0.0
  %47 = vmatpush1.msra.mxu0 %v24
  %48 = vmatprep.subr.mxu0 0.0
  %49 = vmatpush1.msra.mxu0 %v25
  %50 = vmatprep.subr.mxu0 0.0
  %51 = vmatpush1.msra.mxu0 %v26
  %52 = vmatprep.subr.mxu0 0.0
  %53 = vmatpush1.msra.mxu0 %v27
  %54 = vmatprep.subr.mxu0 0.0
  %55 = vmatpush1.msra.mxu0 %v28
  %56 = vmatprep.subr.mxu0 0.0
  %57 = vmatpush1.msra.mxu0 0.0
  %58 = vmatprep.subr.mxu0 0.0
  %59 = vmatpush1.msra.mxu0 0.0
  %60 = vmatprep.subr.mxu0 0.0
  %61 = vmatpush1.msra.mxu0 0.0
  %62 = vmatprep.subr.mxu0 0.0
  %63 = vmatpush1.msra.mxu0 0.0
  %64 = vmatprep.subr.mxu0 0.0
  %65 = vmatpush1.msra.mxu0 0.0
  %66 = vmatprep.subr.mxu0 0.0
  %67 = vmatpush1.msra.mxu0 0.0
  %68 = vmatprep.subr.mxu0 0.0
  %69 = vmatpush1.msra.mxu0 0.0
  %70 = vmatprep.subr.mxu0 0.0
  %71 = vmatpush1.msra.mxu0 0.0
  %72 = vmatprep.subr.mxu0 0.0
  %73 = vmatpush1.msra.mxu0 0.0
  %74 = vmatprep.subr.mxu0 0.0
  %75 = vmatpush1.msra.mxu0 0.0
  %76 = vmatprep.subr.mxu0 0.0
  %77 = vmatpush1.msra.mxu0 0.0
  %78 = vmatprep.subr.mxu0 0.0
  %79 = vmatpush1.msra.mxu0 0.0
  %80 = vmatprep.subr.mxu0 0.0
  %81 = vmatpush1.msra.mxu0 0.0
  %82 = vmatprep.subr.mxu0 0.0
  %83 = vmatpush1.msra.mxu0 0.0
  %84 = vmatprep.subr.mxu0 0.0
  %85 = vmatpush1.msra.mxu0 0.0
  %86 = vmatprep.subr.mxu0 0.0
  %87 = vmatpush1.msra.mxu0 0.0
  %88 = vmatprep.subr.mxu0 0.0
  %89 = vmatpush1.msra.mxu0 0.0
  %90 = vmatprep.subr.mxu0 0.0
  %91 = vmatpush1.msra.mxu0 0.0
  %92 = vmatprep.subr.mxu0 0.0
  %93 = vmatpush1.msra.mxu0 0.0
  %94 = vmatprep.subr.mxu0 0.0
  %95 = vmatpush1.msra.mxu0 0.0
  %96 = vmatprep.subr.mxu0 0.0
  %97 = vmatpush1.msra.mxu0 0.0
  %98 = vmatprep.subr.mxu0 0.0
  %99 = vmatpush1.msra.mxu0 0.0
  %100 = vmatprep.subr.mxu0 0.0
  %101 = vmatpush1.msra.mxu0 0.0
  %102 = vmatprep.subr.mxu0 0.0
  %103 = vmatpush1.msra.mxu0 0.0
  %104 = vmatprep.mubr.f32.mxu0 0.0
  %105 = vmatmul.mubr.f32.gmra.mrb[0].mxu0 %v38
  %v106 = vpop.f32.mrb[0].mxu0
  %v107 = vadd.f32 %v34, %v106
  %v108 = vpop.f32.mrb[0].mxu0
  %109 = vdwg.mxu0
  %vm110 = vcmp.gt.f32.partialorder %v107, 0.0
  %v111 = vmul.f32 %v107, 0.01
  %v112 = vsel %vm110, %v107, %v111
  %v113 = vld [vmem:[%s3] sm:$0xff]
  %v114 = vld [vmem:[%s3 + $0x8] sm:$0xff]
  %v115 = vld [vmem:[%s3 + $0x10] sm:$0xff]
  %v116 = vld [vmem:[%s3 + $0x18] sm:$0xff]
  %v117 = vld [vmem:[%s4] sm:$0x1]
  %v119 = vlaneseq
  %v120 = vshrl.u32 %v119, 7
  %v121 = vsub.s32 0, %v120
  %v122 = vrot.slane %v117, %v121
  %vm124 = vcmask 261120
  %v126 = vsel %vm124, %v112, 0
  %128 = vmatprep.subr.mxu0 0.0
  %129 = vmatpush1.msra.mxu0 %v113
  %130 = vmatprep.subr.mxu0 0.0
  %131 = vmatpush1.msra.mxu0 %v114
  %132 = vmatprep.subr.mxu0 0.0
  %133 = vmatpush1.msra.mxu0 %v115
  %134 = vmatprep.subr.mxu0 0.0
  %135 = vmatpush1.msra.mxu0 %v116
  %136 = vmatprep.subr.mxu0 0.0
  %137 = vmatpush1.msra.mxu0 0.0
  %138 = vmatprep.subr.mxu0 0.0
  %139 = vmatpush1.msra.mxu0 0.0
  %140 = vmatprep.subr.mxu0 0.0
  %141 = vmatpush1.msra.mxu0 0.0
  %142 = vmatprep.subr.mxu0 0.0
  %143 = vmatpush1.msra.mxu0 0.0
  %144 = vmatprep.subr.mxu0 0.0
  %145 = vmatpush1.msra.mxu0 0.0
  %146 = vmatprep.subr.mxu0 0.0
  %147 = vmatpush1.msra.mxu0 0.0
  %148 = vmatprep.subr.mxu0 0.0
  %149 = vmatpush1.msra.mxu0 0.0
  %150 = vmatprep.subr.mxu0 0.0
  %151 = vmatpush1.msra.mxu0 0.0
  %152 = vmatprep.subr.mxu0 0.0
  %153 = vmatpush1.msra.mxu0 0.0
  %154 = vmatprep.subr.mxu0 0.0
  %155 = vmatpush1.msra.mxu0 0.0
  %156 = vmatprep.subr.mxu0 0.0
  %157 = vmatpush1.msra.mxu0 0.0
  %158 = vmatprep.subr.mxu0 0.0
  %159 = vmatpush1.msra.mxu0 0.0
  %160 = vmatprep.subr.mxu0 0.0
  %161 = vmatpush1.msra.mxu0 0.0
  %162 = vmatprep.subr.mxu0 0.0
  %163 = vmatpush1.msra.mxu0 0.0
  %164 = vmatprep.subr.mxu0 0.0
  %165 = vmatpush1.msra.mxu0 0.0
  %166 = vmatprep.subr.mxu0 0.0
  %167 = vmatpush1.msra.mxu0 0.0
  %168 = vmatprep.subr.mxu0 0.0
  %169 = vmatpush1.msra.mxu0 0.0
  %170 = vmatprep.subr.mxu0 0.0
  %171 = vmatpush1.msra.mxu0 0.0
  %172 = vmatprep.subr.mxu0 0.0
  %173 = vmatpush1.msra.mxu0 0.0
  %174 = vmatprep.subr.mxu0 0.0
  %175 = vmatpush1.msra.mxu0 0.0
  %176 = vmatprep.subr.mxu0 0.0
  %177 = vmatpush1.msra.mxu0 0.0
  %178 = vmatprep.subr.mxu0 0.0
  %179 = vmatpush1.msra.mxu0 0.0
  %180 = vmatprep.subr.mxu0 0.0
  %181 = vmatpush1.msra.mxu0 0.0
  %182 = vmatprep.subr.mxu0 0.0
  %183 = vmatpush1.msra.mxu0 0.0
  %184 = vmatprep.subr.mxu0 0.0
  %185 = vmatpush1.msra.mxu0 0.0
  %186 = vmatprep.subr.mxu0 0.0
  %187 = vmatpush1.msra.mxu0 0.0
  %188 = vmatprep.subr.mxu0 0.0
  %189 = vmatpush1.msra.mxu0 0.0
  %190 = vmatprep.subr.mxu0 0.0
  %191 = vmatpush1.msra.mxu0 0.0
  %192 = vmatprep.mubr.f32.mxu0 0.0
  %193 = vmatmul.mubr.f32.gmra.mrb[0].mxu0 %v126
  %v194 = vpop.f32.mrb[0].mxu0
  %v195 = vadd.f32 %v122, %v194
  %v196 = vpop.f32.mrb[0].mxu0
  %197 = vdwg.mxu0
  %198 = vst [vmem:[%s5] sm:$0xff] %v195
  // Predicated region
  $region22: #{scan_nn_forward.1} parent=0 // pred_check
    _
  $region23: #{scan_nn_forward.1} parent=0 // pred_check_branch
    %200 = sbr.rel (0) target = $region25
  $region24: #{scan_nn_forward.1} parent=0 // pred_region
    _
  $region25: #{scan_nn_forward.1} parent=0 // pred_fallthru
    _
  // Predicated region
  $region26: #{scan_nn_forward.1} parent=0 // pred_check
    _
  $region27: #{scan_nn_forward.1} parent=0 // pred_check_branch
    %202 = sbr.rel (0) target = $region29
  $region28: #{scan_nn_forward.1} parent=0 // pred_region
    _
  $region29: #{scan_nn_forward.1} parent=0 // pred_fallthru
    _

</llo_original>
